<compile_context>
chip_gen: v7x
topology: tpu7x:2x2x1
jax: 0.10.0
libtpu: 0.0.40
codegen_flags: <defaults>
</compile_context>

<pallas_src>
import math

import jax
import jax.numpy as jnp
from jax.experimental import pallas as pl
from jax.experimental.pallas import tpu as pltpu


class SigmoidScheduler:
    """Deterministic re-implementation of the module's weight scheduler.

    Sweeps x linearly from min_x to max_x over num_steps and returns
    sigmoid(x). At step 0 (inference / fresh module) the weight is
    sigmoid(min_x).
    """

    def __init__(self, min_x=-5.0, max_x=5.0, num_steps=1000):
        self.min_x = float(min_x)
        self.max_x = float(max_x)
        self.num_steps = int(num_steps)
        self.current_step = 0

    def set_num_steps(self, num_steps):
        self.num_steps = int(num_steps)

    def get(self):
        frac = self.current_step / max(self.num_steps, 1)
        x = self.min_x + (self.max_x - self.min_x) * frac
        return 1.0 / (1.0 + math.exp(-x))

    def step(self):
        self.current_step = min(self.current_step + 1, self.num_steps)


def _cdiv(a, b):
    return -(-a // b)


def _blend_kernel(w_ref, swin_ref, perc_ref, out_ref):
    # Scalar weight read from SMEM rides the scalar slot (free); compute the
    # blend in f32 and cast back so bf16/fp16 inputs lower cleanly on every
    # generation (v5e has no bf16 VPU).  HBM-bound, so VALU work is hidden.
    pw = w_ref[0, 0]
    sw = 1.0 - pw
    s = swin_ref[...].astype(jnp.float32)
    p = perc_ref[...].astype(jnp.float32)
    out_ref[...] = (sw * s + pw * p).astype(out_ref.dtype)


def adaptor_residual_connection(swin_encoder_output, perceiver_decoder_output,
                                perceiver_weight):
    """Inference forward of AdaptorResidualConnection.

    output = (1 - w) * swin + w * perceiver, scalar w.
    """
    # TODO(synk): training-only behaviors (scheduler.step(), pathway dropout /
    # detach of the swin pathway) are autograd/state side effects with no
    # forward value change, so they are not reproduced in the kernel.
    assert swin_encoder_output.shape == perceiver_decoder_output.shape
    orig_shape = swin_encoder_output.shape
    dtype = swin_encoder_output.dtype
    n = math.prod(orig_shape)
    itemsize = jnp.dtype(dtype).itemsize
    sub = max(8, 32 // itemsize)  # sublane multiple: 8 (f32) / 16 (bf16)

    # Lane-dense layout: widest power-of-two multiple of 128 (<=1024) that
    # divides n.  Conv feature maps from the autoencoder always hit this path.
    if n % 128 == 0:
        lane = 128
        while lane < 1024 and n % (lane * 2) == 0:
            lane *= 2
        padded_n = n
    else:
        # Rare fallback for odd element counts: pad only the sub-128 tail.
        # TODO(synk): this path still costs one pad + one slice copy.
        lane = 128
        padded_n = _cdiv(n, lane) * lane
    rows = padded_n // lane

    # ~4 MiB blocks per stream: per-step HBM time stays well above the fixed
    # ~0.35us grid-step overhead even at v7x's 3.2 TB/s.  3 streams x 2
    # buffers x 4 MiB = ~24 MiB of VMEM; vmem_limit_bytes below covers v5e's
    # 16 MiB scoped default and fits v7x's 64 MiB physical VMEM.
    target_rows = max(sub, ((4 << 20) // (lane * itemsize)) // sub * sub)

    if rows <= target_rows:
        if rows >= 2 * sub:
            # Split into >=2 blocks so the "parallel" axis can shard across
            # both v7x TensorCores even for small/medium activations.
            tr = _cdiv(_cdiv(rows, 2), sub) * sub
        else:
            tr = rows  # tiny: single full-extent block (always legal)
    else:
        tr = target_rows

    def _prep(x):
        flat = x.reshape(-1)
        if padded_n != n:
            flat = jnp.pad(flat, (0, padded_n - n))
        return flat.reshape(rows, lane)

    swin2 = _prep(swin_encoder_output)
    perc2 = _prep(perceiver_decoder_output)

    # Scalar weight goes through SMEM: no recompile per scheduler value, and
    # traced (jit) weights are supported.
    w_arr = jnp.asarray(perceiver_weight, dtype=jnp.float32).reshape(1, 1)

    out2 = pl.pallas_call(
        _blend_kernel,
        out_shape=jax.ShapeDtypeStruct((rows, lane), dtype),
        grid=(pl.cdiv(rows, tr),),  # ragged last block is masked by the pipeline
        in_specs=[
            pl.BlockSpec(memory_space=pltpu.MemorySpace.SMEM),
            pl.BlockSpec((tr, lane), lambda r: (r, 0)),
            pl.BlockSpec((tr, lane), lambda r: (r, 0)),
        ],
        out_specs=pl.BlockSpec((tr, lane), lambda r: (r, 0)),
        compiler_params=pltpu.CompilerParams(
            dimension_semantics=("parallel",),
            vmem_limit_bytes=48 << 20,
        ),
    )(w_arr, swin2, perc2)

    out_flat = out2.reshape(-1)
    if padded_n != n:
        out_flat = out_flat[:n]
    return out_flat.reshape(orig_shape)


if __name__ == "__main__":
    key = jax.random.PRNGKey(0)
    k1, k2, k3, k4, k5, k6 = jax.random.split(key, 6)

    scheduler = SigmoidScheduler(min_x=-5, max_x=5)
    scheduler.set_num_steps(1000)
    pw = scheduler.get()  # step 0 -> sigmoid(-5)
    pw32 = jnp.float32(pw)

    def ref_fn(s, p):
        return (1.0 - pw32) * s + pw32 * p

    # Case 1: small 5-D (b, c, d, h, w) shape consistent with the module.
    shp1 = (2, 4, 8, 8, 16)
    swin1 = jax.random.normal(k1, shp1, dtype=jnp.float32)
    perc1 = jax.random.normal(k2, shp1, dtype=jnp.float32)
    out1 = jax.block_until_ready(adaptor_residual_connection(swin1, perc1, pw))
    assert out1.shape == shp1
    assert jnp.allclose(out1, ref_fn(swin1, perc1), atol=1e-6, rtol=1e-6)

    # Case 2: larger shape exercising the multi-block "parallel" grid path.
    shp2 = (2, 4, 16, 16, 32)
    swin2 = jax.random.normal(k3, shp2, dtype=jnp.float32)
    perc2 = jax.random.normal(k4, shp2, dtype=jnp.float32)
    out2 = jax.block_until_ready(adaptor_residual_connection(swin2, perc2, pw))
    assert out2.shape == shp2
    assert jnp.allclose(out2, ref_fn(swin2, perc2), atol=1e-6, rtol=1e-6)

    # Case 3: awkward element count exercising the tail-pad fallback.
    shp3 = (2, 3, 5, 7, 9)
    swin3 = jax.random.normal(k5, shp3, dtype=jnp.float32)
    perc3 = jax.random.normal(k6, shp3, dtype=jnp.float32)
    out3 = jax.block_until_ready(adaptor_residual_connection(swin3, perc3, pw))
    assert out3.shape == shp3
    assert jnp.allclose(out3, ref_fn(swin3, perc3), atol=1e-6, rtol=1e-6)

    # Also works under jit with a traced weight (single compile per shape,
    # no recompilation per scheduler value).
    jitted = jax.jit(adaptor_residual_connection)
    out1j = jax.block_until_ready(jitted(swin1, perc1, pw32))
    assert jnp.allclose(out1j, ref_fn(swin1, perc1), atol=1e-6, rtol=1e-6)

    print("KERNEL_OK")
</pallas_src>

<mosaic_0001>
module attributes {stable_mosaic.version = 11 : i64} {
  func.func @_blend_kernel(%arg0: i32, %arg1: memref<1x1xf32, #tpu.memory_space<smem>>, %arg2: memref<8x1024xf32, #tpu.memory_space<vmem>>, %arg3: memref<8x1024xf32, #tpu.memory_space<vmem>>, %arg4: memref<8x1024xf32, #tpu.memory_space<vmem>>) attributes {dimension_semantics = [#tpu.dimension_semantics<parallel>], iteration_bounds = array<i64: 1>, scalar_prefetch = 0 : i64, scratch_operands = 0 : i64, tpu.core_type = #tpu.core_type<tc>, window_params = [{transform_indices = @transform_0, window_bounds = array<i64: 1, 1>}, {transform_indices = @transform_1, window_bounds = array<i64: 8, 1024>}, {transform_indices = @transform_2, window_bounds = array<i64: 8, 1024>}, {transform_indices = @transform_3, window_bounds = array<i64: 8, 1024>}]} {
    %c0 = arith.constant 0 : index
    %c0_0 = arith.constant 0 : index
    %0 = memref.load %arg1[%c0, %c0_0] : memref<1x1xf32, #tpu.memory_space<smem>>
    %cst = arith.constant 1.000000e+00 : f32
    %1 = arith.subf %cst, %0 : f32
    %c0_1 = arith.constant 0 : index
    %c0_2 = arith.constant 0 : index
    %2 = vector.load %arg2[%c0_1, %c0_2] : memref<8x1024xf32, #tpu.memory_space<vmem>>, vector<8x1024xf32>
    %c0_3 = arith.constant 0 : index
    %c0_4 = arith.constant 0 : index
    %3 = vector.load %arg3[%c0_3, %c0_4] : memref<8x1024xf32, #tpu.memory_space<vmem>>, vector<8x1024xf32>
    %4 = vector.broadcast %1 : f32 to vector<8x1024xf32>
    %5 = arith.mulf %4, %2 : vector<8x1024xf32>
    %6 = vector.broadcast %0 : f32 to vector<8x1024xf32>
    %7 = arith.mulf %6, %3 : vector<8x1024xf32>
    %8 = arith.addf %5, %7 : vector<8x1024xf32>
    %c0_5 = arith.constant 0 : index
    %c0_6 = arith.constant 0 : index
    %9 = vector.load %arg4[%c0_5, %c0_6] : memref<8x1024xf32, #tpu.memory_space<vmem>>, vector<8x1024xf32>
    tpu.vector_store %arg4[%c0_5, %c0_6], %8 {strides = array<i32>} : memref<8x1024xf32, #tpu.memory_space<vmem>>, vector<8x1024xf32>,
    return
  }
  func.func @transform_0(%arg0: i32) -> (i32, i32) {
    %c0_i32 = arith.constant 0 : i32
    %c0_i32_0 = arith.constant 0 : i32
    %c0_i32_1 = arith.constant 0 : i32
    return %c0_i32, %c0_i32_0 : i32, i32
  }
  func.func @transform_1(%arg0: i32) -> (i32, i32) {
    %c0_i32 = arith.constant 0 : i32
    %c0_i32_0 = arith.constant 0 : i32
    return %arg0, %c0_i32 : i32, i32
  }
  func.func @transform_2(%arg0: i32) -> (i32, i32) {
    %c0_i32 = arith.constant 0 : i32
    %c0_i32_0 = arith.constant 0 : i32
    return %arg0, %c0_i32 : i32, i32
  }
  func.func @transform_3(%arg0: i32) -> (i32, i32) {
    %c0_i32 = arith.constant 0 : i32
    %c0_i32_0 = arith.constant 0 : i32
    return %arg0, %c0_i32 : i32, i32
  }
}

</mosaic_0001>

<llo_original>
// kernel: tpu_custom_call.1
$region0: #{tpu_custom_call.1}
  #allocation0 [shape = 'u32[]', space=smem, size = 0x4, offset = 0x4, fixed_abs, tag = 'smem constant byte address 0x4 - core index']
  #allocation1 [shape = 'u32[144,128]{1,0:T(1,128)}', space=vmem, size = 0x12000, scoped, tag = 'internal scratch']
  #allocation2 [shape = 'f32[1,1]{1,0:T(1,128)S(6)}', space=smem, size = 0x200, scoped, tag = 'scoped memory for tpu_custom_call.1']
  %s0 = inlined_call_operand.<no memory space> [shape: f32[1,1], index: 0, kind: input, shape index: {}]
  %s1 = inlined_call_operand.hbm [shape: f32[8,1024], index: 1, kind: input, shape index: {}]
  %s2 = inlined_call_operand.hbm [shape: f32[8,1024], index: 2, kind: input, shape index: {}]
  %s3 = inlined_call_operand.hbm [shape: f32[8,1024], index: 3, kind: output, shape index: {}]
  %s4 = sld [smem:[#allocation0]]
  $region30: #{tpu_custom_call.1} parent=0
    _
  %s6 = ssub.s32 1, %s4
  %s7 = scalar_select 0, %s6, %s4
  %8 = sst [smem:[#allocation2]] %s0
  $region1: #{tpu_custom_call.1} parent=0
    #allocation3 [shape = 'u8[32768]{0}', space=vmem, size = 0x8000, scoped, tag = 'input window, operand 1, single buffered']
    #allocation4 [shape = 's32[1]{0}', space=sflag, size = 0x4, scoped, tag = 'scoped memory for tpu_custom_call.1']
    #allocation5 [shape = 's32[1]{0}', space=sflag, size = 0x4, scoped, tag = 'scoped memory for tpu_custom_call.1']
    #allocation6 [shape = 'u8[32768]{0}', space=vmem, size = 0x8000, scoped, tag = 'input window, operand 2, single buffered']
    #allocation7 [shape = 's32[1]{0}', space=sflag, size = 0x4, scoped, tag = 'scoped memory for tpu_custom_call.1']
    #allocation8 [shape = 'u8[32768]{0}', space=vmem, size = 0x8000, scoped, tag = 'output window, operand 0, single buffered']
    %9 = vsyncpa [#allocation4], 0
    %10 = vsyncpa [#allocation7], 0
    %11 = vsyncpa [#allocation5], 0
    // Predicated region
    $region2: #{tpu_custom_call.1} parent=1 // pred_check
      _
    $region3: #{tpu_custom_call.1} parent=1 // pred_check_branch
      %13 = sbr.rel (0) target = $region5
    $region4: #{tpu_custom_call.1} parent=1 // pred_region
      _
    $region5: #{tpu_custom_call.1} parent=1 // pred_fallthru
      _
    // Predicated region
    $region6: #{tpu_custom_call.1} parent=1 // pred_check
      _
    $region7: #{tpu_custom_call.1} parent=1 // pred_check_branch
      %15 = sbr.rel (0) target = $region9
    $region8: #{tpu_custom_call.1} parent=1 // pred_region
      %s17 = ssub.s32 1024, 1024
      %18 = vsyncadd [#allocation4], %s17
      %s20 = sshll.u32 [#allocation3], 4
      %s21 = int_to_ptr.vmem [resolvable:$true] %s20
      %23 = dma.hbm_to_vmem [thread:$0]  %s1, 1024, %s21, [#allocation4]
    $region9: #{tpu_custom_call.1} parent=1 // pred_fallthru
      _
    // Predicated region
    $region10: #{tpu_custom_call.1} parent=1 // pred_check
      _
    $region11: #{tpu_custom_call.1} parent=1 // pred_check_branch
      %25 = sbr.rel (0) target = $region13
    $region12: #{tpu_custom_call.1} parent=1 // pred_region
      %s27 = ssub.s32 1024, 1024
      %28 = vsyncadd [#allocation7], %s27
      %s30 = sshll.u32 [#allocation6], 4
      %s31 = int_to_ptr.vmem [resolvable:$true] %s30
      %33 = dma.hbm_to_vmem [thread:$0]  %s2, 1024, %s31, [#allocation7]
    $region13: #{tpu_custom_call.1} parent=1 // pred_fallthru
      _
    // Predicated region
    $region14: #{tpu_custom_call.1} parent=1 // pred_check
      _
    $region15: #{tpu_custom_call.1} parent=1 // pred_check_branch
      %35 = sbr.rel (0) target = $region17
    $region16: #{tpu_custom_call.1} parent=1 // pred_region
      %36 = dma.done [#allocation4], 1024
    $region17: #{tpu_custom_call.1} parent=1 // pred_fallthru
      _
    // Predicated region
    $region18: #{tpu_custom_call.1} parent=1 // pred_check
      _
    $region19: #{tpu_custom_call.1} parent=1 // pred_check_branch
      %38 = sbr.rel (0) target = $region21
    $region20: #{tpu_custom_call.1} parent=1 // pred_region
      %39 = dma.done [#allocation7], 1024
    $region21: #{tpu_custom_call.1} parent=1 // pred_fallthru
      _
    %s40 = sld [smem:[#allocation2]]
    %s41 = ssub.f32 1.0, %s40
    %v42 = vld [vmem:[#allocation3] sm:$0xff]
    %v43 = vld [vmem:[#allocation3 + $0x8] sm:$0xff]
    %v44 = vld [vmem:[#allocation3 + $0x10] sm:$0xff]
    %v45 = vld [vmem:[#allocation3 + $0x18] sm:$0xff]
    %v46 = vld [vmem:[#allocation3 + $0x20] sm:$0xff]
    %v47 = vld [vmem:[#allocation3 + $0x28] sm:$0xff]
    %v48 = vld [vmem:[#allocation3 + $0x30] sm:$0xff]
    %v49 = vld [vmem:[#allocation3 + $0x38] sm:$0xff]
    %v50 = vld [vmem:[#allocation6] sm:$0xff]
    %v51 = vld [vmem:[#allocation6 + $0x8] sm:$0xff]
    %v52 = vld [vmem:[#allocation6 + $0x10] sm:$0xff]
    %v53 = vld [vmem:[#allocation6 + $0x18] sm:$0xff]
    %v54 = vld [vmem:[#allocation6 + $0x20] sm:$0xff]
    %v55 = vld [vmem:[#allocation6 + $0x28] sm:$0xff]
    %v56 = vld [vmem:[#allocation6 + $0x30] sm:$0xff]
    %v57 = vld [vmem:[#allocation6 + $0x38] sm:$0xff]
    %v58 = vstv %s41
    %v59 = vmul.f32 %v58, %v42
    %v60 = vmul.f32 %v58, %v43
    %v61 = vmul.f32 %v58, %v44
    %v62 = vmul.f32 %v58, %v45
    %v63 = vmul.f32 %v58, %v46
    %v64 = vmul.f32 %v58, %v47
    %v65 = vmul.f32 %v58, %v48
    %v66 = vmul.f32 %v58, %v49
    %v67 = vstv %s40
    %v68 = vmul.f32 %v67, %v50
    %v69 = vmul.f32 %v67, %v51
    %v70 = vmul.f32 %v67, %v52
    %v71 = vmul.f32 %v67, %v53
    %v72 = vmul.f32 %v67, %v54
    %v73 = vmul.f32 %v67, %v55
    %v74 = vmul.f32 %v67, %v56
    %v75 = vmul.f32 %v67, %v57
    %v76 = vadd.f32 %v59, %v68
    %v77 = vadd.f32 %v60, %v69
    %v78 = vadd.f32 %v61, %v70
    %v79 = vadd.f32 %v62, %v71
    %v80 = vadd.f32 %v63, %v72
    %v81 = vadd.f32 %v64, %v73
    %v82 = vadd.f32 %v65, %v74
    %v83 = vadd.f32 %v66, %v75
    %84 = vst [vmem:[#allocation8] sm:$0xff] %v76
    %85 = vst [vmem:[#allocation8 + $0x8] sm:$0xff] %v77
    %86 = vst [vmem:[#allocation8 + $0x10] sm:$0xff] %v78
    %87 = vst [vmem:[#allocation8 + $0x18] sm:$0xff] %v79
    %88 = vst [vmem:[#allocation8 + $0x20] sm:$0xff] %v80
    %89 = vst [vmem:[#allocation8 + $0x28] sm:$0xff] %v81
    %90 = vst [vmem:[#allocation8 + $0x30] sm:$0xff] %v82
    %91 = vst [vmem:[#allocation8 + $0x38] sm:$0xff] %v83
    // Predicated region
    $region22: #{tpu_custom_call.1} parent=1 // pred_check
      _
    $region23: #{tpu_custom_call.1} parent=1 // pred_check_branch
      %93 = sbr.rel (0) target = $region25
    $region24: #{tpu_custom_call.1} parent=1 // pred_region
      %s95 = ssub.s32 1024, 1024
      %96 = vsyncadd [#allocation5], %s95
      %s98 = sshll.u32 [#allocation8], 4
      %s99 = int_to_ptr.vmem [resolvable:$true] %s98
      %101 = dma.vmem_to_hbm [thread:$0]  %s99, 1024, %s3, [#allocation5]
    $region25: #{tpu_custom_call.1} parent=1 // pred_fallthru
      _
    // Predicated region
    $region26: #{tpu_custom_call.1} parent=1 // pred_check
      _
    $region27: #{tpu_custom_call.1} parent=1 // pred_check_branch
      %103 = sbr.rel (0) target = $region29
    $region28: #{tpu_custom_call.1} parent=1 // pred_region
      %104 = dma.done [#allocation5], 1024
    $region29: #{tpu_custom_call.1} parent=1 // pred_fallthru
      _
    %105 = vsyncpa [#allocation4], 1
    %106 = vsyncpa [#allocation7], 1
    %107 = vsyncpa [#allocation5], 1

</llo_original>
